<compile_context>
chip_gen: v6e
topology: v6e:2x2x1
jax: 0.10.0
libtpu: 0.0.40
codegen_flags: <defaults>
</compile_context>

<pallas_src>
import functools
import math
from functools import partial

import numpy as np

import jax
import jax.numpy as jnp
from jax.experimental import pallas as pl
from jax.experimental.pallas import tpu as pltpu


# ----------------------------------------------------------------------------
# signatory.logsignature_channels replacement (number of Lyndon words).
# ----------------------------------------------------------------------------
def _mobius(n: int) -> int:
    if n == 1:
        return 1
    result, m, p = 1, n, 2
    while p * p <= m:
        if m % p == 0:
            m //= p
            if m % p == 0:
                return 0
            result = -result
        p += 1
    if m > 1:
        result = -result
    return result


def logsignature_channels(channels: int, depth: int) -> int:
    total = 0
    for k in range(1, depth + 1):
        s = 0
        for j in range(1, k + 1):
            if k % j == 0:
                s += _mobius(j) * channels ** (k // j)
        total += s // k
    return total


# ----------------------------------------------------------------------------
# Fused forward kernel.
#
#   coefficients[:, :path_dim] = z                       (standard normal "bm")
#   coefficients[:, path_dim:] = mean + exp(logvar)^0.5 * z         ("levy")
#   ang  = t * coefficients @ logsigs^T          (fake and real stacked on N)
#   d_b  = sum_j w_j * exp(i ang_{b,j})   with w = +1/Nf, -1/Nr, 0 (padding)
#   loss = -1/B * sum_b (Re d_b)^2 + (Im d_b)^2
# ----------------------------------------------------------------------------
def _fused_forward_kernel(mean_ref, logvar_ref, z_ref, x_ref, w_ref,
                          re_ref, im_ref, coef_ref, *,
                          path_dim, t, chunks):
    k = pl.program_id(1)          # sample-tile axis (innermost, "arbitrary")

    @pl.when(k == 0)
    def _init():
        mean = mean_ref[0, 0]
        std = jnp.exp(0.5 * logvar_ref[0, 0])
        zz = z_ref[...]                                          # (B, L) f32
        col = jax.lax.broadcasted_iota(jnp.int32, zz.shape, 1)
        # single iid-normal draw + column mask == the torch concat of two
        # independent randn tensors (disjoint columns).
        coef = jnp.where(col < path_dim, zz, mean + std * zz)
        # fold the trace-time constant t into the tiny (B, L) operand once.
        coef_ref[...] = (t * coef).astype(coef_ref.dtype)
        re_ref[...] = jnp.zeros_like(re_ref)
        im_ref[...] = jnp.zeros_like(im_ref)

    # (B, L) @ (L, tile) -> (B, tile) angles; bf16 MXU, f32 accumulate.
    ang = jnp.dot(coef_ref[...], x_ref[...],
                  preferred_element_type=jnp.float32)

    # Host-precomputed lane-dense weight row: +1/n_fake (fake columns),
    # -1/n_real (real columns), 0 (padding).  Padding columns have angle 0,
    # so cos(0)*0 = 0 and sin(0)*0 = 0 -> exact.
    # NOTE: cos/sin kept in f32 (v5e EUP has no bf16 path; bf16 on v6e/v7x is
    # a possible 2x EUP win but needs accuracy validation first).
    w = w_ref[...]                                # (1, tile) f32
    wc = w * jnp.cos(ang)                         # (B, tile)
    ws = w * jnp.sin(ang)

    # Lane-dense accumulation: only VPU adds per tile (no per-tile XLU
    # cross-lane reduce, no masked (B,1) read-modify-write).  The single
    # 128-lane reduction happens on the tiny (C, B, 128) partials in JAX.
    acc_re = re_ref[...]
    acc_im = im_ref[...]
    for j in range(chunks):                       # chunks = tile // 128, static
        sl = slice(j * 128, (j + 1) * 128)
        acc_re = acc_re + wc[:, sl]
        acc_im = acc_im + ws[:, sl]
    re_ref[...] = acc_re
    im_ref[...] = acc_im


def _pick_tile(L, B, total_cols, *, max_tile=8192,
               vmem_budget=16 * 1024 * 1024):
    """Largest 128-multiple sample tile that fits the per-step VMEM budget.

    Per step (double-buffered where pipelined) we hold:
      * 2 x (L, tile) bf16 logsig buffers,
      * 2 x (8, tile) f32 weight-row buffers (1 row padded to 8 sublanes),
      * ~8 x (B, tile) f32 elementwise temporaries (ang, cos, sin, w*cos, ...).
    Budget of 16 MiB leaves headroom under the 32 MiB scoped limit we request
    explicitly (v7x: 64 MiB physical per TC; v5e default scoped is 16 MiB).
    """
    b_rows = max(8, ((B + 7) // 8) * 8)
    bytes_per_col = (2 * (2 * L)           # bf16 logsig tile, double-buffered
                     + 2 * (8 * 4)         # f32 weight row, double-buffered
                     + 8 * (b_rows * 4))   # f32 elementwise temporaries
    tile = min(max_tile, vmem_budget // bytes_per_col)
    tile = max(128, (tile // 128) * 128)
    return min(tile, total_cols)


@functools.lru_cache(maxsize=None)
def _weight_row(n_fake, fake_width, n_real, total_width):
    """Cached (1, total_width) f32 row: +1/Nf, 0 pad, -1/Nr, 0 pad."""
    w = np.zeros((1, total_width), np.float32)
    w[0, :n_fake] = 1.0 / n_fake
    w[0, fake_width:fake_width + n_real] = -1.0 / n_real
    return jnp.asarray(w)


def fused_characteristic_loss(levy_mean, levy_logvar, z, fake_cf, real_cf, *,
                              path_dim, t, batch_size,
                              max_tile=8192, num_core_splits=2):
    """Single pallas_call implementing the whole discriminator forward."""
    B, L = z.shape
    assert B == batch_size  # loss divides by batch_size while summing B rows
    assert fake_cf.logsigs_t.shape[0] == L and real_cf.logsigs_t.shape[0] == L
    n_fake, n_real = fake_cf.n, real_cf.n
    assert n_fake > 0 and n_real > 0
    wf = fake_cf.logsigs_t.shape[1]          # already 128-multiples, bf16, (L, N)
    wr = real_cf.logsigs_t.shape[1]
    total = wf + wr

    tile = _pick_tile(L, B, total, max_tile=max_tile)
    num_tiles = -(-total // tile)
    # Leading "parallel" axis: lets v7x shard the sample-tile range across its
    # two TensorCores; no effect on 1-TC v5e/v6e beyond two tiny partials.
    C = max(1, min(num_core_splits, num_tiles))
    T = -(-num_tiles // C)                   # tiles per core
    padded_total = C * T * tile

    # Single per-forward pass over the N-scaling operand (inputs are already
    # transposed / bf16 / 128-padded at construction); extra pad columns get
    # weight 0 and contribute exactly nothing.
    parts = [fake_cf.logsigs_t, real_cf.logsigs_t]
    if padded_total > total:
        parts.append(jnp.zeros((L, padded_total - total), jnp.bfloat16))
    x_t = jnp.concatenate(parts, axis=1)

    w_row = _weight_row(n_fake, wf, n_real, padded_total)

    kernel = partial(_fused_forward_kernel, path_dim=path_dim, t=float(t),
                     chunks=tile // 128)

    out_re, out_im = pl.pallas_call(
        kernel,
        out_shape=(jax.ShapeDtypeStruct((C, B, 128), jnp.float32),
                   jax.ShapeDtypeStruct((C, B, 128), jnp.float32)),
        grid_spec=pltpu.PrefetchScalarGridSpec(
            num_scalar_prefetch=0,
            grid=(C, T),
            in_specs=[
                pl.BlockSpec(memory_space=pltpu.MemorySpace.SMEM),  # levy_mean
                pl.BlockSpec(memory_space=pltpu.MemorySpace.SMEM),  # levy_logvar
                pl.BlockSpec((B, L), lambda c, k: (0, 0)),          # z (resident)
                pl.BlockSpec((L, tile), lambda c, k: (0, c * T + k)),   # logsig tile
                pl.BlockSpec((1, tile), lambda c, k: (0, c * T + k)),   # weight tile
            ],
            out_specs=[
                # per-core lane-dense partial accumulators, resident across k
                pl.BlockSpec((None, B, 128), lambda c, k: (c, 0, 0)),
                pl.BlockSpec((None, B, 128), lambda c, k: (c, 0, 0)),
            ],
            scratch_shapes=[
                pltpu.VMEM((B, L), jnp.bfloat16),   # t * coefficients
            ]),
        compiler_params=pltpu.CompilerParams(
            dimension_semantics=("parallel", "arbitrary"),
            vmem_limit_bytes=32 * 1024 * 1024),
    )(levy_mean.astype(jnp.float32), levy_logvar.astype(jnp.float32),
      z.astype(jnp.float32), x_t, w_row)

    # Tiny (C, B, 128) partials -> scalar loss in plain JAX (one 128-lane
    # reduce + cross-core sum; negligible vs. the kernel).
    dre = jnp.sum(out_re, axis=(0, 2))       # (B,)  Re(char_fake - char_real)
    dim = jnp.sum(out_im, axis=(0, 2))       # (B,)  Im(char_fake - char_real)
    return (-1.0 / batch_size) * jnp.sum(dre * dre + dim * dim)


# ----------------------------------------------------------------------------
# Empirical characteristic function "callable" carrying its logsig samples.
# Stored pre-transposed to (L, N_pad), bf16, zero-padded to a multiple of 128
# lanes at construction, so the per-forward path never re-lays-out the only
# operand that scales with N.
# ----------------------------------------------------------------------------
class EmpiricalCharacteristic:
    """phi(lambda) = (1/N) sum_n exp(i * t * <lambda, x_n>)."""

    def __init__(self, logsigs):  # logsigs: (N, L)
        x = jnp.asarray(logsigs, jnp.float32)
        self.n = int(x.shape[0])
        self.logsig_length = int(x.shape[1])
        n_pad = ((self.n + 127) // 128) * 128
        xt = x.T.astype(jnp.bfloat16)                     # (L, N) bf16
        if n_pad != self.n:
            xt = jnp.pad(xt, ((0, 0), (0, n_pad - self.n)))
        self.logsigs_t = xt                               # (L, N_pad)


# ----------------------------------------------------------------------------
# Module wrapper (JAX glue mirroring the PyTorch class).
# ----------------------------------------------------------------------------
class IIDGaussianCharacteristicDiscriminator:
    def __init__(self, batch_size: int, path_dim: int, logsig_level: int = 2,
                 key=jax.random.PRNGKey(0)):
        self.batch_size = batch_size
        self.path_dim = path_dim
        self.logsig_length = logsignature_channels(path_dim, logsig_level)
        # nn.init.kaiming_normal_ on a (1,1) tensor -> N(0, sqrt(2/fan_in)=sqrt(2))
        k1, k2 = jax.random.split(key)
        self.levy_mean = (math.sqrt(2.0)
                          * jax.random.normal(k1, (1, 1), jnp.float32))
        self.levy_logvar = (math.sqrt(2.0)
                            * jax.random.normal(k2, (1, 1), jnp.float32))

    def sample_coefficients(self, key):
        # API parity with the PyTorch module; the fused forward kernel inlines
        # this sampling on-chip, so this standalone version is plain JAX.
        z = jax.random.normal(
            key, (self.batch_size, self.logsig_length), jnp.float32)
        std = jnp.exp(0.5 * self.levy_logvar[0, 0])
        levy = self.levy_mean[0, 0] + std * z[:, self.path_dim:]
        return jnp.concatenate([z[:, :self.path_dim], levy], axis=-1)

    def forward(self, fake_characteristic, real_characteristic, key, t=0.1):
        # TODO(synk): arbitrary user-supplied characteristic callables cannot
        # be fused into the kernel; this fused path assumes empirical CFs
        # (EmpiricalCharacteristic objects carrying logsignature samples).
        z = jax.random.normal(
            key, (self.batch_size, self.logsig_length), jnp.float32)
        d_loss = fused_characteristic_loss(
            self.levy_mean, self.levy_logvar, z,
            fake_characteristic, real_characteristic,
            path_dim=self.path_dim, t=t, batch_size=self.batch_size)
        return d_loss, [self.levy_mean, self.levy_logvar]


if __name__ == "__main__":
    key = jax.random.PRNGKey(0)
    k_params, k_fwd, k_fake, k_real = jax.random.split(key, 4)

    batch_size, path_dim, logsig_level = 8, 4, 2
    disc = IIDGaussianCharacteristicDiscriminator(
        batch_size, path_dim, logsig_level, key=k_params)
    L = disc.logsig_length  # 4 + C(4,2) = 10

    n_samples = 16
    fake_logsigs = jax.random.normal(k_fake, (n_samples, L), jnp.float32)
    real_logsigs = 0.9 * jax.random.normal(k_real, (n_samples, L), jnp.float32) + 0.1

    fake_cf = EmpiricalCharacteristic(fake_logsigs)
    real_cf = EmpiricalCharacteristic(real_logsigs)

    d_loss, params = disc.forward(fake_cf, real_cf, k_fwd, t=0.1)
    jax.block_until_ready(d_loss)
    assert d_loss.shape == () and jnp.isfinite(d_loss)
    print("KERNEL_OK")
</pallas_src>

<mosaic_0001>
module attributes {stable_mosaic.version = 11 : i64} {
  func.func @_fused_forward_kernel(%arg0: i32, %arg1: i32, %arg2: memref<1x1xf32, #tpu.memory_space<smem>>, %arg3: memref<1x1xf32, #tpu.memory_space<smem>>, %arg4: memref<8x10xf32, #tpu.memory_space<vmem>>, %arg5: memref<10x256xbf16, #tpu.memory_space<vmem>>, %arg6: memref<1x256xf32, #tpu.memory_space<vmem>>, %arg7: memref<1x8x128xf32, #tpu.memory_space<vmem>>, %arg8: memref<1x8x128xf32, #tpu.memory_space<vmem>>, %arg9: memref<8x10xbf16, #tpu.memory_space<vmem>>) attributes {dimension_semantics = [#tpu.dimension_semantics<parallel>, #tpu.dimension_semantics<arbitrary>], iteration_bounds = array<i64: 1, 1>, scalar_prefetch = 0 : i64, scratch_operands = 1 : i64, tpu.core_type = #tpu.core_type<tc>, window_params = [{transform_indices = @transform_0, window_bounds = array<i64: 1, 1>}, {transform_indices = @transform_1, window_bounds = array<i64: 1, 1>}, {pipeline_mode = #tpu.pipeline_mode<synchronous>, transform_indices = @transform_2, window_bounds = array<i64: 8, 10>}, {transform_indices = @transform_3, window_bounds = array<i64: 10, 256>}, {transform_indices = @transform_4, window_bounds = array<i64: 1, 256>}, {transform_indices = @transform_5, window_bounds = array<i64: 1, 8, 128>}, {transform_indices = @transform_6, window_bounds = array<i64: 1, 8, 128>}]} {
    %c0_i32 = arith.constant 0 : i32
    %0 = arith.cmpi eq, %arg1, %c0_i32 : i32
    %1 = arith.extui %0 : i1 to i32
    %c0_i32_0 = arith.constant 0 : i32
    %2 = arith.cmpi ne, %1, %c0_i32_0 : i32
    scf.if %2 {
      %c0_18 = arith.constant 0 : index
      %c0_19 = arith.constant 0 : index
      %31 = memref.load %arg2[%c0_18, %c0_19] : memref<1x1xf32, #tpu.memory_space<smem>>
      %c0_20 = arith.constant 0 : index
      %c0_21 = arith.constant 0 : index
      %32 = memref.load %arg3[%c0_20, %c0_21] : memref<1x1xf32, #tpu.memory_space<smem>>
      %cst_22 = arith.constant 5.000000e-01 : f32
      %33 = arith.mulf %cst_22, %32 : f32
      %34 = math.exp %33 : f32
      %c0_23 = arith.constant 0 : index
      %c0_24 = arith.constant 0 : index
      %35 = vector.load %arg4[%c0_23, %c0_24] : memref<8x10xf32, #tpu.memory_space<vmem>>, vector<8x10xf32>
      %36 = tpu.iota {dimensions = array<i32: 1>} : vector<8x10xi32>
      %c4_i32 = arith.constant 4 : i32
      %37 = vector.broadcast %c4_i32 : i32 to vector<8x10xi32>
      %38 = arith.cmpi slt, %36, %37 : vector<8x10xi32>
      %39 = vector.broadcast %34 : f32 to vector<8x10xf32>
      %40 = arith.mulf %39, %35 : vector<8x10xf32>
      %41 = vector.broadcast %31 : f32 to vector<8x10xf32>
      %42 = arith.addf %41, %40 : vector<8x10xf32>
      %43 = arith.select %38, %35, %42 : vector<8x10xi1>, vector<8x10xf32>
      %cst_25 = arith.constant 1.000000e-01 : f32
      %44 = vector.broadcast %cst_25 : f32 to vector<8x10xf32>
      %45 = arith.mulf %44, %43 : vector<8x10xf32>
      %46 = arith.truncf %45 : vector<8x10xf32> to vector<8x10xbf16>
      %c0_26 = arith.constant 0 : index
      %c0_27 = arith.constant 0 : index
      %47 = vector.load %arg9[%c0_26, %c0_27] : memref<8x10xbf16, #tpu.memory_space<vmem>>, vector<8x10xbf16>
      tpu.vector_store %arg9[%c0_26, %c0_27], %46 {strides = array<i32>} : memref<8x10xbf16, #tpu.memory_space<vmem>>, vector<8x10xbf16>,
      %cst_28 = arith.constant 0.000000e+00 : f32
      %48 = vector.broadcast %cst_28 : f32 to vector<8x128xf32>
      %c0_29 = arith.constant 0 : index
      %c0_30 = arith.constant 0 : index
      %c0_31 = arith.constant 0 : index
      %49 = vector.load %arg7[%c0_29, %c0_30, %c0_31] : memref<1x8x128xf32, #tpu.memory_space<vmem>>, vector<1x8x128xf32>
      %50 = vector.shape_cast %49 : vector<1x8x128xf32> to vector<8x128xf32>
      %51 = vector.shape_cast %48 : vector<8x128xf32> to vector<1x8x128xf32>
      tpu.vector_store %arg7[%c0_29, %c0_30, %c0_31], %51 {strides = array<i32>} : memref<1x8x128xf32, #tpu.memory_space<vmem>>, vector<1x8x128xf32>,
      %cst_32 = arith.constant 0.000000e+00 : f32
      %52 = vector.broadcast %cst_32 : f32 to vector<8x128xf32>
      %c0_33 = arith.constant 0 : index
      %c0_34 = arith.constant 0 : index
      %c0_35 = arith.constant 0 : index
      %53 = vector.load %arg8[%c0_33, %c0_34, %c0_35] : memref<1x8x128xf32, #tpu.memory_space<vmem>>, vector<1x8x128xf32>
      %54 = vector.shape_cast %53 : vector<1x8x128xf32> to vector<8x128xf32>
      %55 = vector.shape_cast %52 : vector<8x128xf32> to vector<1x8x128xf32>
      tpu.vector_store %arg8[%c0_33, %c0_34, %c0_35], %55 {strides = array<i32>} : memref<1x8x128xf32, #tpu.memory_space<vmem>>, vector<1x8x128xf32>,
    } else {
    }
    %c0 = arith.constant 0 : index
    %c0_1 = arith.constant 0 : index
    %3 = vector.load %arg9[%c0, %c0_1] : memref<8x10xbf16, #tpu.memory_space<vmem>>, vector<8x10xbf16>
    %c0_2 = arith.constant 0 : index
    %c0_3 = arith.constant 0 : index
    %4 = vector.load %arg5[%c0_2, %c0_3] : memref<10x256xbf16, #tpu.memory_space<vmem>>, vector<10x256xbf16>
    %cst = arith.constant dense<0.000000e+00> : vector<8x256xf32>
    %5 = tpu.matmul %3, %4, %cst {dimension_numbers = #tpu.dot_dimension_numbers<[1], [0], [0], [1], [0, 0, 1, 1], [], []>} : vector<8x10xbf16>, vector<10x256xbf16>, vector<8x256xf32> -> vector<8x256xf32>
    %c0_4 = arith.constant 0 : index
    %c0_5 = arith.constant 0 : index
    %6 = vector.load %arg6[%c0_4, %c0_5] : memref<1x256xf32, #tpu.memory_space<vmem>>, vector<1x256xf32>
    %7 = math.cos %5 : vector<8x256xf32>
    %8 = vector.broadcast %6 : vector<1x256xf32> to vector<8x256xf32>
    %9 = arith.mulf %8, %7 : vector<8x256xf32>
    %10 = math.sin %5 : vector<8x256xf32>
    %11 = vector.broadcast %6 : vector<1x256xf32> to vector<8x256xf32>
    %12 = arith.mulf %11, %10 : vector<8x256xf32>
    %c0_6 = arith.constant 0 : index
    %c0_7 = arith.constant 0 : index
    %c0_8 = arith.constant 0 : index
    %13 = vector.load %arg7[%c0_6, %c0_7, %c0_8] : memref<1x8x128xf32, #tpu.memory_space<vmem>>, vector<1x8x128xf32>
    %14 = vector.shape_cast %13 : vector<1x8x128xf32> to vector<8x128xf32>
    %c0_9 = arith.constant 0 : index
    %c0_10 = arith.constant 0 : index
    %c0_11 = arith.constant 0 : index
    %15 = vector.load %arg8[%c0_9, %c0_10, %c0_11] : memref<1x8x128xf32, #tpu.memory_space<vmem>>, vector<1x8x128xf32>
    %16 = vector.shape_cast %15 : vector<1x8x128xf32> to vector<8x128xf32>
    %17 = vector.extract_strided_slice %9 {offsets = [0, 0], sizes = [8, 128], strides = [1, 1]} : vector<8x256xf32> to vector<8x128xf32>
    %18 = arith.addf %14, %17 : vector<8x128xf32>
    %19 = vector.extract_strided_slice %12 {offsets = [0, 0], sizes = [8, 128], strides = [1, 1]} : vector<8x256xf32> to vector<8x128xf32>
    %20 = arith.addf %16, %19 : vector<8x128xf32>
    %21 = vector.extract_strided_slice %9 {offsets = [0, 128], sizes = [8, 128], strides = [1, 1]} : vector<8x256xf32> to vector<8x128xf32>
    %22 = arith.addf %18, %21 : vector<8x128xf32>
    %23 = vector.extract_strided_slice %12 {offsets = [0, 128], sizes = [8, 128], strides = [1, 1]} : vector<8x256xf32> to vector<8x128xf32>
    %24 = arith.addf %20, %23 : vector<8x128xf32>
    %c0_12 = arith.constant 0 : index
    %c0_13 = arith.constant 0 : index
    %c0_14 = arith.constant 0 : index
    %25 = vector.load %arg7[%c0_12, %c0_13, %c0_14] : memref<1x8x128xf32, #tpu.memory_space<vmem>>, vector<1x8x128xf32>
    %26 = vector.shape_cast %25 : vector<1x8x128xf32> to vector<8x128xf32>
    %27 = vector.shape_cast %22 : vector<8x128xf32> to vector<1x8x128xf32>
    tpu.vector_store %arg7[%c0_12, %c0_13, %c0_14], %27 {strides = array<i32>} : memref<1x8x128xf32, #tpu.memory_space<vmem>>, vector<1x8x128xf32>,
    %c0_15 = arith.constant 0 : index
    %c0_16 = arith.constant 0 : index
    %c0_17 = arith.constant 0 : index
    %28 = vector.load %arg8[%c0_15, %c0_16, %c0_17] : memref<1x8x128xf32, #tpu.memory_space<vmem>>, vector<1x8x128xf32>
    %29 = vector.shape_cast %28 : vector<1x8x128xf32> to vector<8x128xf32>
    %30 = vector.shape_cast %24 : vector<8x128xf32> to vector<1x8x128xf32>
    tpu.vector_store %arg8[%c0_15, %c0_16, %c0_17], %30 {strides = array<i32>} : memref<1x8x128xf32, #tpu.memory_space<vmem>>, vector<1x8x128xf32>,
    return
  }
  func.func @transform_0(%arg0: i32, %arg1: i32) -> (i32, i32) {
    %c0_i32 = arith.constant 0 : i32
    %c0_i32_0 = arith.constant 0 : i32
    %c0_i32_1 = arith.constant 0 : i32
    return %c0_i32, %c0_i32_0 : i32, i32
  }
  func.func @transform_1(%arg0: i32, %arg1: i32) -> (i32, i32) {
    %c0_i32 = arith.constant 0 : i32
    %c0_i32_0 = arith.constant 0 : i32
    %c0_i32_1 = arith.constant 0 : i32
    return %c0_i32, %c0_i32_0 : i32, i32
  }
  func.func @transform_2(%arg0: i32, %arg1: i32) -> (i32, i32) {
    %c0_i32 = arith.constant 0 : i32
    %c0_i32_0 = arith.constant 0 : i32
    %c0_i32_1 = arith.constant 0 : i32
    return %c0_i32, %c0_i32_0 : i32, i32
  }
  func.func @transform_3(%arg0: i32, %arg1: i32) -> (i32, i32) {
    %c1_i32 = arith.constant 1 : i32
    %0 = arith.muli %arg0, %c1_i32 : i32
    %1 = arith.addi %0, %arg1 : i32
    %c0_i32 = arith.constant 0 : i32
    %c0_i32_0 = arith.constant 0 : i32
    return %c0_i32, %1 : i32, i32
  }
  func.func @transform_4(%arg0: i32, %arg1: i32) -> (i32, i32) {
    %c1_i32 = arith.constant 1 : i32
    %0 = arith.muli %arg0, %c1_i32 : i32
    %1 = arith.addi %0, %arg1 : i32
    %c0_i32 = arith.constant 0 : i32
    %c0_i32_0 = arith.constant 0 : i32
    return %c0_i32, %1 : i32, i32
  }
  func.func @transform_5(%arg0: i32, %arg1: i32) -> (i32, i32, i32) {
    %c0_i32 = arith.constant 0 : i32
    %c0_i32_0 = arith.constant 0 : i32
    %c0_i32_1 = arith.constant 0 : i32
    return %arg0, %c0_i32, %c0_i32_0 : i32, i32, i32
  }
  func.func @transform_6(%arg0: i32, %arg1: i32) -> (i32, i32, i32) {
    %c0_i32 = arith.constant 0 : i32
    %c0_i32_0 = arith.constant 0 : i32
    %c0_i32_1 = arith.constant 0 : i32
    return %arg0, %c0_i32, %c0_i32_0 : i32, i32, i32
  }
}

</mosaic_0001>

<llo_original>
// kernel: tpu_custom_call.1
$region0: #{tpu_custom_call.1}
  #allocation0 [shape = 'u32[]', space=smem, size = 0x4, offset = 0x4, fixed_abs, tag = 'smem constant byte address 0x4 - core index']
  #allocation1 [shape = 'u32[144,128]{1,0:T(1,128)}', space=vmem, size = 0x12000, scoped, tag = 'internal scratch']
  #allocation2 [shape = 'bf16[8,10]{1,0:T(8,128)(2,1)}', space=vmem, size = 0x800, scoped, tag = 'scratch operand']
  #allocation3 [shape = 'f32[1,1]{1,0:T(1,128)S(6)}', space=smem, size = 0x200, scoped, tag = 'scoped memory for tpu_custom_call.1']
  #allocation4 [shape = 'f32[1,1]{1,0:T(1,128)S(6)}', space=smem, size = 0x200, scoped, tag = 'scoped memory for tpu_custom_call.1']
  %s0 = inlined_call_operand.<no memory space> [shape: f32[1,1], index: 0, kind: input, shape index: {}]
  %s1 = inlined_call_operand.<no memory space> [shape: f32[1,1], index: 1, kind: input, shape index: {}]
  %s2 = inlined_call_operand.hbm [shape: f32[8,10], index: 2, kind: input, shape index: {}]
  %s3 = inlined_call_operand.hbm [shape: bf16[10,256], index: 3, kind: input, shape index: {}]
  %s4 = inlined_call_operand.vmem [shape: f32[1,256], index: 4, kind: input, shape index: {}]
  %s5 = inlined_call_operand.hbm [shape: f32[1,8,128], index: 5, kind: output, shape index: {0}]
  %s6 = inlined_call_operand.hbm [shape: f32[1,8,128], index: 6, kind: output, shape index: {1}]
  %7 = xla_tuple %s5, %s6
  %s8 = sld [smem:[#allocation0]]
  $region50: #{tpu_custom_call.1} parent=0
    _
  %s10 = ssub.s32 1, %s8
  %s11 = scalar_select 0, %s10, %s8
  %12 = sst [smem:[#allocation3]] %s0
  %13 = sst [smem:[#allocation4]] %s1
  $region1: #{tpu_custom_call.1} parent=0
    #allocation5 [shape = 'u8[4096]{0}', space=vmem, size = 0x1000, scoped, tag = 'input window, operand 2, single buffered']
    #allocation6 [shape = 's32[1]{0}', space=sflag, size = 0x4, scoped, tag = 'scoped memory for tpu_custom_call.1']
    #allocation7 [shape = 's32[1]{0}', space=sflag, size = 0x4, scoped, tag = 'scoped memory for tpu_custom_call.1']
    #allocation8 [shape = 'u8[8192]{0}', space=vmem, size = 0x2000, scoped, tag = 'input window, operand 3, single buffered']
    #allocation9 [shape = 's32[1]{0}', space=sflag, size = 0x4, scoped, tag = 'scoped memory for tpu_custom_call.1']
    #allocation10 [shape = 'u8[4096]{0}', space=vmem, size = 0x1000, scoped, tag = 'output window, operand 0, single buffered']
    #allocation11 [shape = 'u8[4096]{0}', space=vmem, size = 0x1000, scoped, tag = 'output window, operand 1, single buffered']
    #allocation12 [shape = 's32[1]{0}', space=sflag, size = 0x4, scoped, tag = 'scoped memory for tpu_custom_call.1']
    %14 = vsyncpa [#allocation6], 0
    %15 = vsyncpa [#allocation9], 0
    %16 = vsyncpa [#allocation7], 0
    %17 = vsyncpa [#allocation12], 0
    // Predicated region
    $region2: #{tpu_custom_call.1} parent=1 // pred_check
      _
    $region3: #{tpu_custom_call.1} parent=1 // pred_check_branch
      %19 = sbr.rel (0) target = $region5
    $region4: #{tpu_custom_call.1} parent=1 // pred_region
      _
    $region5: #{tpu_custom_call.1} parent=1 // pred_fallthru
      _
    // Predicated region
    $region6: #{tpu_custom_call.1} parent=1 // pred_check
      _
    $region7: #{tpu_custom_call.1} parent=1 // pred_check_branch
      %21 = sbr.rel (0) target = $region9
    $region8: #{tpu_custom_call.1} parent=1 // pred_region
      _
    $region9: #{tpu_custom_call.1} parent=1 // pred_fallthru
      _
    // Predicated region
    $region10: #{tpu_custom_call.1} parent=1 // pred_check
      _
    $region11: #{tpu_custom_call.1} parent=1 // pred_check_branch
      %23 = sbr.rel (0) target = $region13
    $region12: #{tpu_custom_call.1} parent=1 // pred_region
      %s25 = ssub.s32 128, 128
      %26 = vsyncadd [#allocation6], %s25
      %s28 = sshll.u32 [#allocation5], 4
      %s29 = int_to_ptr.vmem [resolvable:$true] %s28
      %31 = dma.hbm_to_vmem [thread:$0]  %s2, 128, %s29, [#allocation6]
    $region13: #{tpu_custom_call.1} parent=1 // pred_fallthru
      _
    // Predicated region
    $region14: #{tpu_custom_call.1} parent=1 // pred_check
      _
    $region15: #{tpu_custom_call.1} parent=1 // pred_check_branch
      %33 = sbr.rel (0) target = $region17
    $region16: #{tpu_custom_call.1} parent=1 // pred_region
      %s34 = sadd.s32 0, 0
      %s35 = smul.u32 2, %s34
      %s37 = ssub.s32 256, 256
      %38 = vsyncadd [#allocation9], %s37
      %s39 = smul.addr %s35, 64
      %s40 = scalar_lea.hbm %s3, %s39
      %s41 = sshll.u32 [#allocation8], 4
      %s42 = int_to_ptr.vmem [resolvable:$true] %s41
      %47 = dma.hbm_to_vmem [thread:$0]  %s40, 256, %s42, [#allocation9], 128, 128, 8
    $region17: #{tpu_custom_call.1} parent=1 // pred_fallthru
      _
    // Predicated region
    $region18: #{tpu_custom_call.1} parent=1 // pred_check
      _
    $region19: #{tpu_custom_call.1} parent=1 // pred_check_branch
      %49 = sbr.rel (0) target = $region21
    $region20: #{tpu_custom_call.1} parent=1 // pred_region
      %s50 = sadd.s32 0, 0
      %s51 = smul.u32 2, %s50
      %p52 = scmp.lt.s32.totalorder %s51, 1
      %s53 = scalar_select %p52, %s51, 1
      %s54 = scalar_lea.vmem %s4, %s53
      %s55 = sadd.s32 0, 0
      %s56 = smul.u32 2, %s55
    $region21: #{tpu_custom_call.1} parent=1 // pred_fallthru
      _
    // Predicated region
    $region22: #{tpu_custom_call.1} parent=1 // pred_check
      _
    $region23: #{tpu_custom_call.1} parent=1 // pred_check_branch
      %58 = sbr.rel (0) target = $region25
    $region24: #{tpu_custom_call.1} parent=1 // pred_region
      %59 = dma.done [#allocation6], 128
    $region25: #{tpu_custom_call.1} parent=1 // pred_fallthru
      _
    // Predicated region
    $region26: #{tpu_custom_call.1} parent=1 // pred_check
      _
    $region27: #{tpu_custom_call.1} parent=1 // pred_check_branch
      %61 = sbr.rel (0) target = $region29
    $region28: #{tpu_custom_call.1} parent=1 // pred_region
      %62 = dma.done [#allocation9], 256
    $region29: #{tpu_custom_call.1} parent=1 // pred_fallthru
      _
    %s63 = sadd.s32 0, 0
    %s64 = smul.u32 2, %s63
    %p65 = scmp.lt.s32.totalorder %s64, 1
    %s66 = scalar_select %p65, %s64, 1
    %s67 = scalar_lea.vmem %s4, %s66
    %s68 = sadd.s32 0, 0
    %s69 = smul.u32 2, %s68
    %s70 = sadd.s32 0, 0
    %s71 = smul.u32 2, %s70
    %p72 = scmp.lt.s32.totalorder %s71, 1
    %s73 = scalar_select %p72, %s71, 1
    %s74 = scalar_lea.vmem %s4, %s73
    %s75 = sadd.s32 0, 0
    %s76 = smul.u32 2, %s75
    %p78 = scmp.eq.s32.totalorder 0, 0
    // Predicated region
    $region30: #{tpu_custom_call.1} parent=1 // pred_check
      %p79 = pneg %p78
    $region31: #{tpu_custom_call.1} parent=1 // pred_check_branch
      %81 = sbr.rel (%p79) target = $region33
    $region32: #{tpu_custom_call.1} parent=1 // pred_region
      %s82 = sld [smem:[#allocation3]]
      %s83 = sld [smem:[#allocation4]]
      %s84 = smul.f32 %s83, 0.5
      %v85 = vstv %s84
      %v86 = vmul.f32 %v85, 1.442695
      %v87 = vpow.pop %v86
      %s88 = vtos %v87
      %v89 = vld [vmem:[#allocation5] sm:$0xff]
      %v90 = vlaneseq
      %v91 = vand.u32 %v90, 127
      %vm92 = vcmp.lt.s32.totalorder %v91, 4
      %v93 = vstv %s88
      %v94 = vmul.f32 %v93, %v89
      %v95 = vstv %s82
      %v96 = vadd.f32 %v95, %v94
      %v97 = vsel %vm92, %v89, %v96
      %v98 = vmul.f32 %v97, 0.1
      %v99 = vpack.c.bf16 %v98, %v98
      %vm100 = vcmask 76800
      %101 = vst.msk [vmem:[#allocation2] sm:$0xf] %vm100, %v99
      %102 = vst [vmem:[#allocation10] sm:$0xff] 0.0
      %103 = vst [vmem:[#allocation11] sm:$0xff] 0.0
    $region33: #{tpu_custom_call.1} parent=1 // pred_fallthru
      _
    %v104 = vld [vmem:[#allocation2] sm:$0xf]
    %v105 = vld [vmem:[#allocation8] sm:$0xff]
    %v106 = vld [vmem:[#allocation8 + $0x8] sm:$0x11]
    %v109 = vunpack.c.l.b16 %v105
    %v110 = vunpack.c.h.b16 %v105
    %v111 = vunpack.c.l.b16 %v106
    %v112 = vunpack.c.h.b16 %v106
    %v113 = vpack.c.b16 %v111, %v109
    %v114 = vpack.c.b16 %v112, %v110
    %vm115 = vcmask 80896
    %v117 = vsel %vm115, %v104, 0
    %vm119 = vcmask 1044480
    %v121 = vsel %vm119, %v113, 0
    %v124 = vsel %vm119, %v114, 0
    %126 = vmatprep.subr.bf16.mxu0 0
    %127 = vmatpush1.bf16.msra.mxu0 0
    %128 = vmatprep.subr.bf16.mxu0 0
    %129 = vmatpush1.bf16.msra.mxu0 0
    %130 = vmatprep.subr.bf16.mxu0 0
    %131 = vmatpush1.bf16.msra.mxu0 0
    %132 = vmatprep.subr.bf16.mxu0 0
    %133 = vmatpush1.bf16.msra.mxu0 0
    %134 = vmatprep.subr.bf16.mxu0 0
    %135 = vmatpush1.bf16.msra.mxu0 0
    %136 = vmatprep.subr.bf16.mxu0 0
    %137 = vmatpush1.bf16.msra.mxu0 0
    %138 = vmatprep.subr.bf16.mxu0 0
    %139 = vmatpush1.bf16.msra.mxu0 0
    %140 = vmatprep.subr.bf16.mxu0 %v124
    %141 = vmatpush1.bf16.msra.mxu0 %v121
    %142 = vmatprep.subr.bf16.mxu0 0
    %143 = vmatpush2.bf16.msra.mxu0 0
    %144 = vmatprep.subr.bf16.mxu0 0
    %145 = vmatpush2.bf16.msra.mxu0 0
    %146 = vmatprep.subr.bf16.mxu0 0
    %147 = vmatpush2.bf16.msra.mxu0 0
    %148 = vmatprep.subr.bf16.mxu0 0
    %149 = vmatpush2.bf16.msra.mxu0 0
    %150 = vmatprep.subr.bf16.mxu0 0
    %151 = vmatpush2.bf16.msra.mxu0 0
    %152 = vmatprep.subr.bf16.mxu0 0
    %153 = vmatpush2.bf16.msra.mxu0 0
    %154 = vmatprep.subr.bf16.mxu0 0
    %155 = vmatpush2.bf16.msra.mxu0 0
    %156 = vmatprep.subr.bf16.mxu0 0
    %157 = vmatpush2.bf16.msra.mxu0 0
    %158 = vmatprep.mubr.bf16.mxu0 0
    %159 = vmatmul.mubr.bf16.gmra.mxu0 %v117
    %v160 = vpop.f32.mrf.mxu0
    %v161 = vadd.f32 0.0, %v160
    %v162 = vpop.f32.mrf.mxu0
    %v163 = vadd.f32 0.0, %v162
    %v164 = vpop.f32.mrf.mxu0
    %v165 = vpop.f32.mrf.mxu0
    %166 = vdwg.mxu0
    %v167 = vld [vmem:[%s74] sm:$0x3]
    %v168 = vand.u32 2147483647, %v161
    %vm169 = vcmp.le.f32.partialorder %v168, 0.7853982
    %vm170 = vcmp.lt.s32.totalorder %v161, 0
    %v171 = vand.u32 %v161, 2139095040
    %v172 = vshrl.u32 %v171, 23
    %v173 = vsub.s32 %v172, 127
    %v174 = vand.u32 2147483647, %v161
    %v175 = vand.u32 %v174, 8388607
    %v176 = vor.u32 %v175, 8388608
    %v177 = vsub.s32 0, %v176
    %v178 = vadd.s32 %v173, 1
    %vm179 = vcmp.gt.s32.totalorder %v178, 0
    %v180 = vsel %vm179, %v178, 0
    %v181 = vshrl.u32 %v180, 5
    %v182 = vand.u32 %v180, 31
    %v183 = vsub.s32 32, %v182
    %v184 = vshrl.u32 683565275, %v183
    %v185 = vshll.u32 683565275, %v182
    %v186 = vshrl.u32 2475754826, %v183
    %v187 = vor.u32 %v185, %v186
    %v188 = vshll.u32 2475754826, %v182
    %v189 = vshrl.u32 2131351028, %v183
    %v190 = vor.u32 %v188, %v189
    %v191 = vshll.u32 2131351028, %v182
    %v192 = vshrl.u32 2102212464, %v183
    %v193 = vor.u32 %v191, %v192
    %v194 = vshll.u32 2102212464, %v182
    %v195 = vshrl.u32 920167782, %v183
    %v196 = vor.u32 %v194, %v195
    %v197 = vshll.u32 920167782, %v182
    %v198 = vshrl.u32 1326507024, %v183
    %v199 = vor.u32 %v197, %v198
    %vm200 = vcmp.lt.s32.totalorder %v181, 1
    %vm201 = vcmp.lt.s32.totalorder %v181, 2
    %vm202 = vcmp.lt.s32.totalorder %v181, 3
    %vm203 = vcmp.lt.s32.totalorder %v181, 4
    %v204 = vsel %vm200, %v184, %v187
    %v205 = vsel %vm203, %v193, 2102212464
    %v206 = vsel %vm202, %v190, %v205
    %v207 = vsel %vm201, %v204, %v206
    %v208 = vsel %vm200, %v187, %v190
    %v209 = vsel %vm203, %v196, 920167782
    %v210 = vsel %vm202, %v193, %v209
    %v211 = vsel %vm201, %v208, %v210
    %v212 = vsel %vm200, %v190, %v193
    %v213 = vsel %vm203, %v199, 1326507024
    %v214 = vsel %vm202, %v196, %v213
    %v215 = vsel %vm201, %v212, %v214
    %v216 = vshll.u32 %v176, 8
    %v217 = vmul.u32.u64.compose %v216, %v215
    %v218 = vextract.low.u32 %v217
    %v219 = vextract.high.u32 %v217
    %v220 = vmul.u32.u64.compose %v216, %v211
    %v221 = vextract.low.u32 %v220
    %v222 = vextract.high.u32 %v220
    %v223 = vmul.u32 %v216, %v207
    %v224 = vadd.s32 %v219, %v221
    %vm225 = vc.u32 %v219, %v221
    %v226 = vadd.s32 %v222, 1
    %v227 = vsel %vm225, %v226, %v222
    %v228 = vadd.s32 %v223, %v227
    %v229 = vadd.s32 %v228, 536870912
    %v230 = vshrl.u32 %v229, 30
    %v231 = vshll.u32 %v230, 30
    %v232 = vsub.s32 %v228, %v231
    %vm233 = vcmp.lt.s32.totalorder %v232, 0
    %v234 = vsub.s32 0, %v232
    %v235 = vsel %vm233, %v234, %v232
    %v236 = vclz %v235
    %v237 = vsub.s32 %v236, 2
    %vm238 = vcmp.gt.s32.totalorder 0, %v237
    %v239 = vsel %vm238, 0, %v237
    %v240 = vsub.s32 32, %v239
    %v241 = vshll.u32 %v232, %v239
    %v242 = vshrl.u32 %v224, %v240
    %v243 = vor.u32 %v241, %v242
    %v244 = vsub.s32 4294967266, %v239
    %v245 = vadd.s32 %v244, 127
    %v246 = vshll.u32 %v245, 23
    %v247 = vor.u32 4788187, %v246
    %v248 = vand.u32 2147483647, %v247
    %v250 = vcvt.s32.f32 %v243
    %v251 = vmul.f32 %v250, %v248
    %v252 = vxor.u32 %v251, 2147483648
    %v253 = vsel %vm170, %v252, %v251
    %v254 = vsub.s32 4, %v230
    %v255 = vsel %vm170, %v254, %v230
    %v256 = vsel %vm169, %v161, %v253
    %v257 = vsel %vm169, 0, %v255
    %v258 = vcosq.f32.pop %v256
    %v259 = vsinq.f32.pop %v256
    %vm260 = vweird.f32 %v161
    %v261 = vand.u32 %v257, 3
    %vm262 = vcmp.lt.s32.totalorder %v261, 2
    %vm263 = vcmp.eq.s32.totalorder %v261, 0
    %v264 = vxor.u32 %v259, 2147483648
    %v265 = vsel %vm263, %v258, %v264
    %vm266 = vcmp.eq.s32.totalorder %v261, 2
    %v267 = vxor.u32 %v258, 2147483648
    %v268 = vsel %vm266, %v267, %v259
    %v269 = vsel %vm262, %v265, %v268
    %v270 = vsel %vm260, nan, %v269
    %v271 = vand.u32 2147483647, %v163
    %vm272 = vcmp.le.f32.partialorder %v271, 0.7853982
    %vm273 = vcmp.lt.s32.totalorder %v163, 0
    %v274 = vand.u32 %v163, 2139095040
    %v275 = vshrl.u32 %v274, 23
    %v276 = vsub.s32 %v275, 127
    %v277 = vand.u32 2147483647, %v163
    %v278 = vand.u32 %v277, 8388607
    %v279 = vor.u32 %v278, 8388608
    %v280 = vsub.s32 0, %v279
    %v281 = vadd.s32 %v276, 1
    %vm282 = vcmp.gt.s32.totalorder %v281, 0
    %v283 = vsel %vm282, %v281, 0
    %v284 = vshrl.u32 %v283, 5
    %v285 = vand.u32 %v283, 31
    %v286 = vsub.s32 32, %v285
    %v287 = vshrl.u32 683565275, %v286
    %v288 = vshll.u32 683565275, %v285
    %v289 = vshrl.u32 2475754826, %v286
    %v290 = vor.u32 %v288, %v289
    %v291 = vshll.u32 2475754826, %v285
    %v292 = vshrl.u32 2131351028, %v286
    %v293 = vor.u32 %v291, %v292
    %v294 = vshll.u32 2131351028, %v285
    %v295 = vshrl.u32 2102212464, %v286
    %v296 = vor.u32 %v294, %v295
    %v297 = vshll.u32 2102212464, %v285
    %v298 = vshrl.u32 920167782, %v286
    %v299 = vor.u32 %v297, %v298
    %v300 = vshll.u32 920167782, %v285
    %v301 = vshrl.u32 1326507024, %v286
    %v302 = vor.u32 %v300, %v301
    %vm303 = vcmp.lt.s32.totalorder %v284, 1
    %vm304 = vcmp.lt.s32.totalorder %v284, 2
    %vm305 = vcmp.lt.s32.totalorder %v284, 3
    %vm306 = vcmp.lt.s32.totalorder %v284, 4
    %v307 = vsel %vm303, %v287, %v290
    %v308 = vsel %vm306, %v296, 2102212464
    %v309 = vsel %vm305, %v293, %v308
    %v310 = vsel %vm304, %v307, %v309
    %v311 = vsel %vm303, %v290, %v293
    %v312 = vsel %vm306, %v299, 920167782
    %v313 = vsel %vm305, %v296, %v312
    %v314 = vsel %vm304, %v311, %v313
    %v315 = vsel %vm303, %v293, %v296
    %v316 = vsel %vm306, %v302, 1326507024
    %v317 = vsel %vm305, %v299, %v316
    %v318 = vsel %vm304, %v315, %v317
    %v319 = vshll.u32 %v279, 8
    %v320 = vmul.u32.u64.compose %v319, %v318
    %v321 = vextract.low.u32 %v320
    %v322 = vextract.high.u32 %v320
    %v323 = vmul.u32.u64.compose %v319, %v314
    %v324 = vextract.low.u32 %v323
    %v325 = vextract.high.u32 %v323
    %v326 = vmul.u32 %v319, %v310
    %v327 = vadd.s32 %v322, %v324
    %vm328 = vc.u32 %v322, %v324
    %v329 = vadd.s32 %v325, 1
    %v330 = vsel %vm328, %v329, %v325
    %v331 = vadd.s32 %v326, %v330
    %v332 = vadd.s32 %v331, 536870912
    %v333 = vshrl.u32 %v332, 30
    %v334 = vshll.u32 %v333, 30
    %v335 = vsub.s32 %v331, %v334
    %vm336 = vcmp.lt.s32.totalorder %v335, 0
    %v337 = vsub.s32 0, %v335
    %v338 = vsel %vm336, %v337, %v335
    %v339 = vclz %v338
    %v340 = vsub.s32 %v339, 2
    %vm341 = vcmp.gt.s32.totalorder 0, %v340
    %v342 = vsel %vm341, 0, %v340
    %v343 = vsub.s32 32, %v342
    %v344 = vshll.u32 %v335, %v342
    %v345 = vshrl.u32 %v327, %v343
    %v346 = vor.u32 %v344, %v345
    %v347 = vsub.s32 4294967266, %v342
    %v348 = vadd.s32 %v347, 127
    %v349 = vshll.u32 %v348, 23
    %v350 = vor.u32 4788187, %v349
    %v351 = vand.u32 2147483647, %v350
    %v353 = vcvt.s32.f32 %v346
    %v354 = vmul.f32 %v353, %v351
    %v355 = vxor.u32 %v354, 2147483648
    %v356 = vsel %vm273, %v355, %v354
    %v357 = vsub.s32 4, %v333
    %v358 = vsel %vm273, %v357, %v333
    %v359 = vsel %vm272, %v163, %v356
    %v360 = vsel %vm272, 0, %v358
    %v361 = vcosq.f32.pop %v359
    %v362 = vsinq.f32.pop %v359
    %vm363 = vweird.f32 %v163
    %v364 = vand.u32 %v360, 3
    %vm365 = vcmp.lt.s32.totalorder %v364, 2
    %vm366 = vcmp.eq.s32.totalorder %v364, 0
    %v367 = vxor.u32 %v362, 2147483648
    %v368 = vsel %vm366, %v361, %v367
    %vm369 = vcmp.eq.s32.totalorder %v364, 2
    %v370 = vxor.u32 %v361, 2147483648
    %v371 = vsel %vm369, %v370, %v362
    %v372 = vsel %vm365, %v368, %v371
    %v373 = vsel %vm363, nan, %v372
    %v375 = vlaneseq
    %v376 = vshrl.u32 %v375, 7
    %v377 = vsub.s32 0, %v376
    %v378 = vrot.slane %v167, %v377
    %v379 = vlaneseq
    %v380 = vshrl.u32 %v379, 7
    %v381 = vsub.s32 1, %v380
    %v382 = vrot.slane %v167, %v381
    %v385 = vmul.f32 %v378, %v270
    %v386 = vmul.f32 %v382, %v373
    %v387 = vand.u32 2147483647, %v161
    %vm388 = vcmp.le.f32.partialorder %v387, 0.7853982
    %vm389 = vcmp.lt.s32.totalorder %v161, 0
    %v390 = vand.u32 %v161, 2139095040
    %v391 = vshrl.u32 %v390, 23
    %v392 = vsub.s32 %v391, 127
    %v393 = vand.u32 2147483647, %v161
    %v394 = vand.u32 %v393, 8388607
    %v395 = vor.u32 %v394, 8388608
    %v396 = vsub.s32 0, %v395
    %v397 = vadd.s32 %v392, 1
    %vm398 = vcmp.gt.s32.totalorder %v397, 0
    %v399 = vsel %vm398, %v397, 0
    %v400 = vshrl.u32 %v399, 5
    %v401 = vand.u32 %v399, 31
    %v402 = vsub.s32 32, %v401
    %v403 = vshrl.u32 683565275, %v402
    %v404 = vshll.u32 683565275, %v401
    %v405 = vshrl.u32 2475754826, %v402
    %v406 = vor.u32 %v404, %v405
    %v407 = vshll.u32 2475754826, %v401
    %v408 = vshrl.u32 2131351028, %v402
    %v409 = vor.u32 %v407, %v408
    %v410 = vshll.u32 2131351028, %v401
    %v411 = vshrl.u32 2102212464, %v402
    %v412 = vor.u32 %v410, %v411
    %v413 = vshll.u32 2102212464, %v401
    %v414 = vshrl.u32 920167782, %v402
    %v415 = vor.u32 %v413, %v414
    %v416 = vshll.u32 920167782, %v401
    %v417 = vshrl.u32 1326507024, %v402
    %v418 = vor.u32 %v416, %v417
    %vm419 = vcmp.lt.s32.totalorder %v400, 1
    %vm420 = vcmp.lt.s32.totalorder %v400, 2
    %vm421 = vcmp.lt.s32.totalorder %v400, 3
    %vm422 = vcmp.lt.s32.totalorder %v400, 4
    %v423 = vsel %vm419, %v403, %v406
    %v424 = vsel %vm422, %v412, 2102212464
    %v425 = vsel %vm421, %v409, %v424
    %v426 = vsel %vm420, %v423, %v425
    %v427 = vsel %vm419, %v406, %v409
    %v428 = vsel %vm422, %v415, 920167782
    %v429 = vsel %vm421, %v412, %v428
    %v430 = vsel %vm420, %v427, %v429
    %v431 = vsel %vm419, %v409, %v412
    %v432 = vsel %vm422, %v418, 1326507024
    %v433 = vsel %vm421, %v415, %v432
    %v434 = vsel %vm420, %v431, %v433
    %v435 = vshll.u32 %v395, 8
    %v436 = vmul.u32.u64.compose %v435, %v434
    %v437 = vextract.low.u32 %v436
    %v438 = vextract.high.u32 %v436
    %v439 = vmul.u32.u64.compose %v435, %v430
    %v440 = vextract.low.u32 %v439
    %v441 = vextract.high.u32 %v439
    %v442 = vmul.u32 %v435, %v426
    %v443 = vadd.s32 %v438, %v440
    %vm444 = vc.u32 %v438, %v440
    %v445 = vadd.s32 %v441, 1
    %v446 = vsel %vm444, %v445, %v441
    %v447 = vadd.s32 %v442, %v446
    %v448 = vadd.s32 %v447, 536870912
    %v449 = vshrl.u32 %v448, 30
    %v450 = vshll.u32 %v449, 30
    %v451 = vsub.s32 %v447, %v450
    %vm452 = vcmp.lt.s32.totalorder %v451, 0
    %v453 = vsub.s32 0, %v451
    %v454 = vsel %vm452, %v453, %v451
    %v455 = vclz %v454
    %v456 = vsub.s32 %v455, 2
    %vm457 = vcmp.gt.s32.totalorder 0, %v456
    %v458 = vsel %vm457, 0, %v456
    %v459 = vsub.s32 32, %v458
    %v460 = vshll.u32 %v451, %v458
    %v461 = vshrl.u32 %v443, %v459
    %v462 = vor.u32 %v460, %v461
    %v463 = vsub.s32 4294967266, %v458
    %v464 = vadd.s32 %v463, 127
    %v465 = vshll.u32 %v464, 23
    %v466 = vor.u32 4788187, %v465
    %v467 = vand.u32 2147483647, %v466
    %v469 = vcvt.s32.f32 %v462
    %v470 = vmul.f32 %v469, %v467
    %v471 = vxor.u32 %v470, 2147483648
    %v472 = vsel %vm389, %v471, %v470
    %v473 = vsub.s32 4, %v449
    %v474 = vsel %vm389, %v473, %v449
    %v475 = vsel %vm388, %v161, %v472
    %v476 = vsel %vm388, 0, %v474
    %v477 = vcosq.f32.pop %v475
    %v478 = vsinq.f32.pop %v475
    %vm479 = vweird.f32 %v161
    %v480 = vadd.s32 %v476, 3
    %v481 = vand.u32 %v480, 3
    %vm482 = vcmp.lt.s32.totalorder %v481, 2
    %vm483 = vcmp.eq.s32.totalorder %v481, 0
    %v484 = vxor.u32 %v478, 2147483648
    %v485 = vsel %vm483, %v477, %v484
    %vm486 = vcmp.eq.s32.totalorder %v481, 2
    %v487 = vxor.u32 %v477, 2147483648
    %v488 = vsel %vm486, %v487, %v478
    %v489 = vsel %vm482, %v485, %v488
    %v490 = vsel %vm479, nan, %v489
    %v491 = vand.u32 2147483647, %v163
    %vm492 = vcmp.le.f32.partialorder %v491, 0.7853982
    %vm493 = vcmp.lt.s32.totalorder %v163, 0
    %v494 = vand.u32 %v163, 2139095040
    %v495 = vshrl.u32 %v494, 23
    %v496 = vsub.s32 %v495, 127
    %v497 = vand.u32 2147483647, %v163
    %v498 = vand.u32 %v497, 8388607
    %v499 = vor.u32 %v498, 8388608
    %v500 = vsub.s32 0, %v499
    %v501 = vadd.s32 %v496, 1
    %vm502 = vcmp.gt.s32.totalorder %v501, 0
    %v503 = vsel %vm502, %v501, 0
    %v504 = vshrl.u32 %v503, 5
    %v505 = vand.u32 %v503, 31
    %v506 = vsub.s32 32, %v505
    %v507 = vshrl.u32 683565275, %v506
    %v508 = vshll.u32 683565275, %v505
    %v509 = vshrl.u32 2475754826, %v506
    %v510 = vor.u32 %v508, %v509
    %v511 = vshll.u32 2475754826, %v505
    %v512 = vshrl.u32 2131351028, %v506
    %v513 = vor.u32 %v511, %v512
    %v514 = vshll.u32 2131351028, %v505
    %v515 = vshrl.u32 2102212464, %v506
    %v516 = vor.u32 %v514, %v515
    %v517 = vshll.u32 2102212464, %v505
    %v518 = vshrl.u32 920167782, %v506
    %v519 = vor.u32 %v517, %v518
    %v520 = vshll.u32 920167782, %v505
    %v521 = vshrl.u32 1326507024, %v506
    %v522 = vor.u32 %v520, %v521
    %vm523 = vcmp.lt.s32.totalorder %v504, 1
    %vm524 = vcmp.lt.s32.totalorder %v504, 2
    %vm525 = vcmp.lt.s32.totalorder %v504, 3
    %vm526 = vcmp.lt.s32.totalorder %v504, 4
    %v527 = vsel %vm523, %v507, %v510
    %v528 = vsel %vm526, %v516, 2102212464
    %v529 = vsel %vm525, %v513, %v528
    %v530 = vsel %vm524, %v527, %v529
    %v531 = vsel %vm523, %v510, %v513
    %v532 = vsel %vm526, %v519, 920167782
    %v533 = vsel %vm525, %v516, %v532
    %v534 = vsel %vm524, %v531, %v533
    %v535 = vsel %vm523, %v513, %v516
    %v536 = vsel %vm526, %v522, 1326507024
    %v537 = vsel %vm525, %v519, %v536
    %v538 = vsel %vm524, %v535, %v537
    %v539 = vshll.u32 %v499, 8
    %v540 = vmul.u32.u64.compose %v539, %v538
    %v541 = vextract.low.u32 %v540
    %v542 = vextract.high.u32 %v540
    %v543 = vmul.u32.u64.compose %v539, %v534
    %v544 = vextract.low.u32 %v543
    %v545 = vextract.high.u32 %v543
    %v546 = vmul.u32 %v539, %v530
    %v547 = vadd.s32 %v542, %v544
    %vm548 = vc.u32 %v542, %v544
    %v549 = vadd.s32 %v545, 1
    %v550 = vsel %vm548, %v549, %v545
    %v551 = vadd.s32 %v546, %v550
    %v552 = vadd.s32 %v551, 536870912
    %v553 = vshrl.u32 %v552, 30
    %v554 = vshll.u32 %v553, 30
    %v555 = vsub.s32 %v551, %v554
    %vm556 = vcmp.lt.s32.totalorder %v555, 0
    %v557 = vsub.s32 0, %v555
    %v558 = vsel %vm556, %v557, %v555
    %v559 = vclz %v558
    %v560 = vsub.s32 %v559, 2
    %vm561 = vcmp.gt.s32.totalorder 0, %v560
    %v562 = vsel %vm561, 0, %v560
    %v563 = vsub.s32 32, %v562
    %v564 = vshll.u32 %v555, %v562
    %v565 = vshrl.u32 %v547, %v563
    %v566 = vor.u32 %v564, %v565
    %v567 = vsub.s32 4294967266, %v562
    %v568 = vadd.s32 %v567, 127
    %v569 = vshll.u32 %v568, 23
    %v570 = vor.u32 4788187, %v569
    %v571 = vand.u32 2147483647, %v570
    %v573 = vcvt.s32.f32 %v566
    %v574 = vmul.f32 %v573, %v571
    %v575 = vxor.u32 %v574, 2147483648
    %v576 = vsel %vm493, %v575, %v574
    %v577 = vsub.s32 4, %v553
    %v578 = vsel %vm493, %v577, %v553
    %v579 = vsel %vm492, %v163, %v576
    %v580 = vsel %vm492, 0, %v578
    %v581 = vcosq.f32.pop %v579
    %v582 = vsinq.f32.pop %v579
    %vm583 = vweird.f32 %v163
    %v584 = vadd.s32 %v580, 3
    %v585 = vand.u32 %v584, 3
    %vm586 = vcmp.lt.s32.totalorder %v585, 2
    %vm587 = vcmp.eq.s32.totalorder %v585, 0
    %v588 = vxor.u32 %v582, 2147483648
    %v589 = vsel %vm587, %v581, %v588
    %vm590 = vcmp.eq.s32.totalorder %v585, 2
    %v591 = vxor.u32 %v581, 2147483648
    %v592 = vsel %vm590, %v591, %v582
    %v593 = vsel %vm586, %v589, %v592
    %v594 = vsel %vm583, nan, %v593
    %v595 = vmul.f32 %v378, %v490
    %v596 = vmul.f32 %v382, %v594
    %v597 = vld [vmem:[#allocation10] sm:$0xff]
    %v598 = vld [vmem:[#allocation11] sm:$0xff]
    %v599 = vadd.f32 %v597, %v385
    %v600 = vadd.f32 %v598, %v595
    %v601 = vadd.f32 %v599, %v386
    %v602 = vadd.f32 %v600, %v596
    %603 = vst [vmem:[#allocation10] sm:$0xff] %v601
    %604 = vst [vmem:[#allocation11] sm:$0xff] %v602
    // Predicated region
    $region34: #{tpu_custom_call.1} parent=1 // pred_check
      _
    $region35: #{tpu_custom_call.1} parent=1 // pred_check_branch
      %606 = sbr.rel (0) target = $region37
    $region36: #{tpu_custom_call.1} parent=1 // pred_region
      %s608 = ssub.s32 128, 128
      %609 = vsyncadd [#allocation7], %s608
      %s611 = sshll.u32 [#allocation10], 4
      %s612 = int_to_ptr.vmem [resolvable:$true] %s611
      %614 = dma.vmem_to_hbm [thread:$0]  %s612, 128, %s5, [#allocation7]
    $region37: #{tpu_custom_call.1} parent=1 // pred_fallthru
      _
    // Predicated region
    $region38: #{tpu_custom_call.1} parent=1 // pred_check
      _
    $region39: #{tpu_custom_call.1} parent=1 // pred_check_branch
      %616 = sbr.rel (0) target = $region41
    $region40: #{tpu_custom_call.1} parent=1 // pred_region
      %s618 = ssub.s32 128, 128
      %619 = vsyncadd [#allocation12], %s618
      %s621 = sshll.u32 [#allocation11], 4
      %s622 = int_to_ptr.vmem [resolvable:$true] %s621
      %624 = dma.vmem_to_hbm [thread:$0]  %s622, 128, %s6, [#allocation12]
    $region41: #{tpu_custom_call.1} parent=1 // pred_fallthru
      _
    // Predicated region
    $region42: #{tpu_custom_call.1} parent=1 // pred_check
      _
    $region43: #{tpu_custom_call.1} parent=1 // pred_check_branch
      %626 = sbr.rel (0) target = $region45
    $region44: #{tpu_custom_call.1} parent=1 // pred_region
      %627 = dma.done [#allocation7], 128
    $region45: #{tpu_custom_call.1} parent=1 // pred_fallthru
      _
    // Predicated region
    $region46: #{tpu_custom_call.1} parent=1 // pred_check
      _
    $region47: #{tpu_custom_call.1} parent=1 // pred_check_branch
      %629 = sbr.rel (0) target = $region49
    $region48: #{tpu_custom_call.1} parent=1 // pred_region
      %630 = dma.done [#allocation12], 128
    $region49: #{tpu_custom_call.1} parent=1 // pred_fallthru
      _
    %631 = vsyncpa [#allocation6], 1
    %632 = vsyncpa [#allocation9], 1
    %633 = vsyncpa [#allocation7], 1
    %634 = vsyncpa [#allocation12], 1

</llo_original>
